<compile_context>
chip_gen: v6e
topology: v6e:2x2x1
jax: 0.10.0
libtpu: 0.0.40
codegen_flags: <defaults>
</compile_context>

<pallas_src>
import functools

import jax
import jax.numpy as jnp
from jax.experimental import pallas as pl
from jax.experimental.pallas import tpu as pltpu


def _round_up(n, m):
    return ((n + m - 1) // m) * m


# ---------------------------------------------------------------------------
# Fused kernel: one grid step = one tile of batch rows.
#   x tile (tb, S, D) -> pool over S -> Linear/ReLU -> Linear/ReLU -> Linear
# ---------------------------------------------------------------------------
def _mlp_fused_kernel(x_ref, w1_ref, b1_ref, w2_ref, b2_ref, w3_ref, b3_ref,
                      o_ref, *, pool_type, inv_seq_len):
    x = x_ref[...]                                      # (tb, S, D), native dtype

    if pool_type == "mean":
        # f32 accumulation of the sequence sum (no full-tile f32 copy).
        pooled = jnp.sum(x, axis=1, dtype=jnp.float32) * inv_seq_len   # (tb, D)
    elif pool_type == "max":
        # max is order-preserving -> pool in the input's native dtype.
        pooled = jnp.max(x, axis=1)                                    # (tb, D)
    else:
        raise ValueError("Invalid pool_type")

    # Layer 1: Linear -> (Dropout = identity at inference) -> ReLU
    h = jnp.dot(pooled.astype(jnp.bfloat16), w1_ref[...],
                preferred_element_type=jnp.float32) + b1_ref[...]
    h = jnp.maximum(h, 0.0)

    # Layer 2: Linear -> (Dropout = identity) -> ReLU
    h = jnp.dot(h.astype(jnp.bfloat16), w2_ref[...],
                preferred_element_type=jnp.float32) + b2_ref[...]
    h = jnp.maximum(h, 0.0)

    # Output layer: Linear(hidden -> num_classes). Lane-sparse store (C<128)
    # is <1% of traffic -> intentionally not restructured.
    out = jnp.dot(h.astype(jnp.bfloat16), w3_ref[...],
                  preferred_element_type=jnp.float32) + b3_ref[...]

    o_ref[...] = out.astype(o_ref.dtype)


def _vmem_limit_bytes():
    """Per-generation VMEM limit: physical capacity minus 16 MiB headroom."""
    cap = 64 * 1024 * 1024
    try:
        info = pltpu.get_tpu_info()
        cap = int(getattr(info, "vmem_capacity_bytes", cap))
    except Exception:
        pass
    return max(32 * 1024 * 1024, cap - 16 * 1024 * 1024)


def _pick_batch_tile(B, S, D, x_itemsize, resident_bytes, tile_b, vmem_limit):
    """Choose the batch-row tile size.

    - >=2 grid steps whenever B > 8 so the "parallel" axis shards across both
      v7x TensorCores (no effect on single-TC v5e/v6e).
    - Capped so the double-buffered x tile + resident weights fit VMEM.
    """
    if B <= 8:
        return B
    tile_b = max(8, (tile_b // 8) * 8)
    tb = min(tile_b, _round_up(pl.cdiv(B, 2), 8))
    # VMEM budget: double-buffered x tile + (possibly double-buffered) weights
    # + slack for activations and the double-buffered output tile.
    budget = vmem_limit - 2 * resident_bytes - (4 << 20)
    max_tb = budget // (2 * S * D * x_itemsize)
    max_tb = max(8, (int(max_tb) // 8) * 8)
    return int(min(tb, max_tb))


def mlp_pallas(x, w1, b1, w2, b2, w3, b3, *, pool_type="mean", tile_b=1024):
    """x: (B, S, D), f32 or bf16. Weights (in, out); y = x @ W + b (torch Linear)."""
    B, S, D = x.shape
    H = w1.shape[1]
    C = w3.shape[1]
    assert w1.shape == (D, H)
    assert w2.shape == (H, H)      # module requires input_dim == hidden_dim
    assert w3.shape == (H, C)

    # bf16 weights (MXU operand / HBM storage); biases stay f32.
    w1b = w1.astype(jnp.bfloat16)
    w2b = w2.astype(jnp.bfloat16)
    w3b = w3.astype(jnp.bfloat16)
    b1r = b1.reshape(1, H).astype(jnp.float32)
    b2r = b2.reshape(1, H).astype(jnp.float32)
    b3r = b3.reshape(1, C).astype(jnp.float32)

    vmem_limit = _vmem_limit_bytes()
    resident_bytes = ((w1b.size + w2b.size + w3b.size) * 2
                      + (b1r.size + b2r.size + b3r.size) * 4)
    tb = _pick_batch_tile(B, S, D, x.dtype.itemsize, resident_bytes,
                          tile_b, vmem_limit)
    num_tiles = pl.cdiv(B, tb)   # ragged final block handled by Pallas masking

    kernel = functools.partial(_mlp_fused_kernel, pool_type=pool_type,
                               inv_seq_len=1.0 / S)

    return pl.pallas_call(
        kernel,
        out_shape=jax.ShapeDtypeStruct((B, C), jnp.float32),
        grid_spec=pltpu.PrefetchScalarGridSpec(
            num_scalar_prefetch=0,
            grid=(num_tiles,),
            in_specs=[
                pl.BlockSpec((tb, S, D), lambda i: (i, 0, 0)),   # x tile
                pl.BlockSpec((D, H), lambda i: (0, 0)),          # W1 (resident)
                pl.BlockSpec((1, H), lambda i: (0, 0)),          # b1
                pl.BlockSpec((H, H), lambda i: (0, 0)),          # W2 (resident)
                pl.BlockSpec((1, H), lambda i: (0, 0)),          # b2
                pl.BlockSpec((H, C), lambda i: (0, 0)),          # W3 (resident)
                pl.BlockSpec((1, C), lambda i: (0, 0)),          # b3
            ],
            out_specs=pl.BlockSpec((tb, C), lambda i: (i, 0)),
        ),
        compiler_params=pltpu.CompilerParams(
            dimension_semantics=("parallel",),
            vmem_limit_bytes=vmem_limit,
        ),
    )(x, w1b, b1r, w2b, b2r, w3b, b3r)


class MLPPallas:
    """Mirrors the PyTorch MLP module's forward pass (inference)."""

    def __init__(self, w1, b1, w2, b2, w3, b3, pool_type="mean"):
        self.params = (w1, b1, w2, b2, w3, b3)
        self.pool_type = pool_type

    def __call__(self, x, *, tile_b=1024):
        return mlp_pallas(x, *self.params, pool_type=self.pool_type,
                          tile_b=tile_b)


# ---------------------------------------------------------------------------
# Pure-JAX references.
# ---------------------------------------------------------------------------
def _ref_pool(x, pool_type):
    if pool_type == "mean":
        return jnp.sum(x, axis=1, dtype=jnp.float32) * (1.0 / x.shape[1])
    return jnp.max(x, axis=1)


def _ref_mlp_bf16(x, w1, b1, w2, b2, w3, b3, pool_type):
    pooled = _ref_pool(x, pool_type)
    bf = jnp.bfloat16
    h = jnp.maximum(jnp.dot(pooled.astype(bf), w1.astype(bf),
                            preferred_element_type=jnp.float32) + b1, 0.0)
    h = jnp.maximum(jnp.dot(h.astype(bf), w2.astype(bf),
                            preferred_element_type=jnp.float32) + b2, 0.0)
    return jnp.dot(h.astype(bf), w3.astype(bf),
                   preferred_element_type=jnp.float32) + b3


def _ref_mlp_f32(x, w1, b1, w2, b2, w3, b3, pool_type):
    pooled = _ref_pool(x.astype(jnp.float32), pool_type)
    h = jnp.maximum(pooled @ w1 + b1, 0.0)
    h = jnp.maximum(h @ w2 + b2, 0.0)
    return h @ w3 + b3


if __name__ == "__main__":
    # Small shapes consistent with the module: x is (batch, seq, input_dim);
    # input_dim == hidden_dim (required by the module's second Linear).
    B, S, D, H, C = 20, 8, 128, 128, 10

    key = jax.random.PRNGKey(0)
    kx, k1, k2, k3, kb1, kb2, kb3 = jax.random.split(key, 7)

    x = jax.random.normal(kx, (B, S, D), dtype=jnp.float32)
    w1 = jax.random.normal(k1, (D, H), dtype=jnp.float32) / jnp.sqrt(D)
    b1 = 0.01 * jax.random.normal(kb1, (H,), dtype=jnp.float32)
    w2 = jax.random.normal(k2, (H, H), dtype=jnp.float32) / jnp.sqrt(H)
    b2 = 0.01 * jax.random.normal(kb2, (H,), dtype=jnp.float32)
    w3 = jax.random.normal(k3, (H, C), dtype=jnp.float32) / jnp.sqrt(H)
    b3 = 0.01 * jax.random.normal(kb3, (C,), dtype=jnp.float32)

    # mean-pool, f32 input: with B=20 the tile picker chooses tb=16 -> 2 grid
    # steps (exercises the ragged final block with NO host-side padding).
    model_mean = MLPPallas(w1, b1, w2, b2, w3, b3, pool_type="mean")
    out_mean = jax.block_until_ready(model_mean(x))

    # max-pool, bf16 input (halved HBM read, bf16 pooling), tile_b=8 -> 3 grid
    # steps with a ragged final block of 4 rows.
    x_bf16 = x.astype(jnp.bfloat16)
    model_max = MLPPallas(w1, b1, w2, b2, w3, b3, pool_type="max")
    out_max = jax.block_until_ready(model_max(x_bf16, tile_b=8))

    assert out_mean.shape == (B, C)
    assert out_max.shape == (B, C)

    # Tight check vs. references using the same bf16-operand matmuls / dtypes.
    ref_mean_bf = _ref_mlp_bf16(x, w1, b1, w2, b2, w3, b3, "mean")
    ref_max_bf = _ref_mlp_bf16(x_bf16, w1, b1, w2, b2, w3, b3, "max")
    assert jnp.allclose(out_mean, ref_mean_bf, atol=1e-2, rtol=1e-2)
    assert jnp.allclose(out_max, ref_max_bf, atol=1e-2, rtol=1e-2)

    # Loose check vs. full-f32 reference (bf16 operand rounding only).
    ref_mean_f32 = _ref_mlp_f32(x, w1, b1, w2, b2, w3, b3, "mean")
    ref_max_f32 = _ref_mlp_f32(x_bf16, w1, b1, w2, b2, w3, b3, "max")
    assert jnp.allclose(out_mean, ref_mean_f32, atol=1e-1, rtol=1e-1)
    assert jnp.allclose(out_max, ref_max_f32, atol=1e-1, rtol=1e-1)

    print("KERNEL_OK")
</pallas_src>

<mosaic_0001>
module attributes {stable_mosaic.version = 11 : i64} {
  func.func @_mlp_fused_kernel(%arg0: i32, %arg1: memref<16x8x128xf32, #tpu.memory_space<vmem>>, %arg2: memref<128x128xbf16, #tpu.memory_space<vmem>>, %arg3: memref<1x128xf32, #tpu.memory_space<vmem>>, %arg4: memref<128x128xbf16, #tpu.memory_space<vmem>>, %arg5: memref<1x128xf32, #tpu.memory_space<vmem>>, %arg6: memref<128x10xbf16, #tpu.memory_space<vmem>>, %arg7: memref<1x10xf32, #tpu.memory_space<vmem>>, %arg8: memref<16x10xf32, #tpu.memory_space<vmem>>) attributes {dimension_semantics = [#tpu.dimension_semantics<parallel>], iteration_bounds = array<i64: 2>, scalar_prefetch = 0 : i64, scratch_operands = 0 : i64, tpu.core_type = #tpu.core_type<tc>, window_params = [{transform_indices = @transform_0, window_bounds = array<i64: 16, 8, 128>}, {pipeline_mode = #tpu.pipeline_mode<synchronous>, transform_indices = @transform_1, window_bounds = array<i64: 128, 128>}, {pipeline_mode = #tpu.pipeline_mode<synchronous>, transform_indices = @transform_2, window_bounds = array<i64: 1, 128>}, {pipeline_mode = #tpu.pipeline_mode<synchronous>, transform_indices = @transform_3, window_bounds = array<i64: 128, 128>}, {pipeline_mode = #tpu.pipeline_mode<synchronous>, transform_indices = @transform_4, window_bounds = array<i64: 1, 128>}, {pipeline_mode = #tpu.pipeline_mode<synchronous>, transform_indices = @transform_5, window_bounds = array<i64: 128, 10>}, {pipeline_mode = #tpu.pipeline_mode<synchronous>, transform_indices = @transform_6, window_bounds = array<i64: 1, 10>}, {transform_indices = @transform_7, window_bounds = array<i64: 16, 10>}]} {
    %c0 = arith.constant 0 : index
    %c0_0 = arith.constant 0 : index
    %c0_1 = arith.constant 0 : index
    %0 = vector.load %arg1[%c0, %c0_0, %c0_1] : memref<16x8x128xf32, #tpu.memory_space<vmem>>, vector<16x8x128xf32>
    %cst = arith.constant dense<0.000000e+00> : vector<16x128xf32>
    %1 = vector.multi_reduction <add>, %0, %cst [1] : vector<16x8x128xf32> to vector<16x128xf32>
    %cst_2 = arith.constant 1.250000e-01 : f32
    %2 = vector.broadcast %cst_2 : f32 to vector<16x128xf32>
    %3 = arith.mulf %1, %2 : vector<16x128xf32>
    %4 = arith.truncf %3 : vector<16x128xf32> to vector<16x128xbf16>
    %c0_3 = arith.constant 0 : index
    %c0_4 = arith.constant 0 : index
    %5 = vector.load %arg2[%c0_3, %c0_4] : memref<128x128xbf16, #tpu.memory_space<vmem>>, vector<128x128xbf16>
    %cst_5 = arith.constant dense<0.000000e+00> : vector<16x128xf32>
    %6 = tpu.matmul %4, %5, %cst_5 {dimension_numbers = #tpu.dot_dimension_numbers<[1], [0], [0], [1], [0, 0, 1, 1], [], []>} : vector<16x128xbf16>, vector<128x128xbf16>, vector<16x128xf32> -> vector<16x128xf32>
    %c0_6 = arith.constant 0 : index
    %c0_7 = arith.constant 0 : index
    %7 = vector.load %arg3[%c0_6, %c0_7] : memref<1x128xf32, #tpu.memory_space<vmem>>, vector<1x128xf32>
    %8 = vector.broadcast %7 : vector<1x128xf32> to vector<16x128xf32>
    %9 = arith.addf %6, %8 : vector<16x128xf32>
    %cst_8 = arith.constant 0.000000e+00 : f32
    %10 = vector.broadcast %cst_8 : f32 to vector<16x128xf32>
    %11 = arith.maximumf %9, %10 : vector<16x128xf32>
    %12 = arith.truncf %11 : vector<16x128xf32> to vector<16x128xbf16>
    %c0_9 = arith.constant 0 : index
    %c0_10 = arith.constant 0 : index
    %13 = vector.load %arg4[%c0_9, %c0_10] : memref<128x128xbf16, #tpu.memory_space<vmem>>, vector<128x128xbf16>
    %cst_11 = arith.constant dense<0.000000e+00> : vector<16x128xf32>
    %14 = tpu.matmul %12, %13, %cst_11 {dimension_numbers = #tpu.dot_dimension_numbers<[1], [0], [0], [1], [0, 0, 1, 1], [], []>} : vector<16x128xbf16>, vector<128x128xbf16>, vector<16x128xf32> -> vector<16x128xf32>
    %c0_12 = arith.constant 0 : index
    %c0_13 = arith.constant 0 : index
    %15 = vector.load %arg5[%c0_12, %c0_13] : memref<1x128xf32, #tpu.memory_space<vmem>>, vector<1x128xf32>
    %16 = vector.broadcast %15 : vector<1x128xf32> to vector<16x128xf32>
    %17 = arith.addf %14, %16 : vector<16x128xf32>
    %cst_14 = arith.constant 0.000000e+00 : f32
    %18 = vector.broadcast %cst_14 : f32 to vector<16x128xf32>
    %19 = arith.maximumf %17, %18 : vector<16x128xf32>
    %20 = arith.truncf %19 : vector<16x128xf32> to vector<16x128xbf16>
    %c0_15 = arith.constant 0 : index
    %c0_16 = arith.constant 0 : index
    %21 = vector.load %arg6[%c0_15, %c0_16] : memref<128x10xbf16, #tpu.memory_space<vmem>>, vector<128x10xbf16>
    %cst_17 = arith.constant dense<0.000000e+00> : vector<16x10xf32>
    %22 = tpu.matmul %20, %21, %cst_17 {dimension_numbers = #tpu.dot_dimension_numbers<[1], [0], [0], [1], [0, 0, 1, 1], [], []>} : vector<16x128xbf16>, vector<128x10xbf16>, vector<16x10xf32> -> vector<16x10xf32>
    %c0_18 = arith.constant 0 : index
    %c0_19 = arith.constant 0 : index
    %23 = vector.load %arg7[%c0_18, %c0_19] : memref<1x10xf32, #tpu.memory_space<vmem>>, vector<1x10xf32>
    %24 = vector.broadcast %23 : vector<1x10xf32> to vector<16x10xf32>
    %25 = arith.addf %22, %24 : vector<16x10xf32>
    %c0_20 = arith.constant 0 : index
    %c0_21 = arith.constant 0 : index
    %26 = vector.load %arg8[%c0_20, %c0_21] : memref<16x10xf32, #tpu.memory_space<vmem>>, vector<16x10xf32>
    tpu.vector_store %arg8[%c0_20, %c0_21], %25 {strides = array<i32>} : memref<16x10xf32, #tpu.memory_space<vmem>>, vector<16x10xf32>,
    return
  }
  func.func @transform_0(%arg0: i32) -> (i32, i32, i32) {
    %c0_i32 = arith.constant 0 : i32
    %c0_i32_0 = arith.constant 0 : i32
    %c0_i32_1 = arith.constant 0 : i32
    return %arg0, %c0_i32, %c0_i32_0 : i32, i32, i32
  }
  func.func @transform_1(%arg0: i32) -> (i32, i32) {
    %c0_i32 = arith.constant 0 : i32
    %c0_i32_0 = arith.constant 0 : i32
    %c0_i32_1 = arith.constant 0 : i32
    return %c0_i32, %c0_i32_0 : i32, i32
  }
  func.func @transform_2(%arg0: i32) -> (i32, i32) {
    %c0_i32 = arith.constant 0 : i32
    %c0_i32_0 = arith.constant 0 : i32
    %c0_i32_1 = arith.constant 0 : i32
    return %c0_i32, %c0_i32_0 : i32, i32
  }
  func.func @transform_3(%arg0: i32) -> (i32, i32) {
    %c0_i32 = arith.constant 0 : i32
    %c0_i32_0 = arith.constant 0 : i32
    %c0_i32_1 = arith.constant 0 : i32
    return %c0_i32, %c0_i32_0 : i32, i32
  }
  func.func @transform_4(%arg0: i32) -> (i32, i32) {
    %c0_i32 = arith.constant 0 : i32
    %c0_i32_0 = arith.constant 0 : i32
    %c0_i32_1 = arith.constant 0 : i32
    return %c0_i32, %c0_i32_0 : i32, i32
  }
  func.func @transform_5(%arg0: i32) -> (i32, i32) {
    %c0_i32 = arith.constant 0 : i32
    %c0_i32_0 = arith.constant 0 : i32
    %c0_i32_1 = arith.constant 0 : i32
    return %c0_i32, %c0_i32_0 : i32, i32
  }
  func.func @transform_6(%arg0: i32) -> (i32, i32) {
    %c0_i32 = arith.constant 0 : i32
    %c0_i32_0 = arith.constant 0 : i32
    %c0_i32_1 = arith.constant 0 : i32
    return %c0_i32, %c0_i32_0 : i32, i32
  }
  func.func @transform_7(%arg0: i32) -> (i32, i32) {
    %c0_i32 = arith.constant 0 : i32
    %c0_i32_0 = arith.constant 0 : i32
    return %arg0, %c0_i32 : i32, i32
  }
}

</mosaic_0001>

<llo_original>
// kernel: tpu_custom_call.1
$region0: #{tpu_custom_call.1}
  #allocation0 [shape = 'u32[]', space=smem, size = 0x4, offset = 0x4, fixed_abs, tag = 'smem constant byte address 0x4 - core index']
  #allocation1 [shape = 'u32[144,128]{1,0:T(1,128)}', space=vmem, size = 0x12000, scoped, tag = 'internal scratch']
  %s0 = inlined_call_operand.hbm [shape: f32[20,8,128], index: 0, kind: input, shape index: {}]
  %s1 = inlined_call_operand.vmem [shape: bf16[128,128], index: 1, kind: input, shape index: {}]
  %s2 = inlined_call_operand.vmem [shape: f32[1,128], index: 2, kind: input, shape index: {}]
  %s3 = inlined_call_operand.hbm [shape: bf16[128,128], index: 3, kind: input, shape index: {}]
  %s4 = inlined_call_operand.vmem [shape: f32[1,128], index: 4, kind: input, shape index: {}]
  %s5 = inlined_call_operand.vmem [shape: bf16[128,10], index: 5, kind: input, shape index: {}]
  %s6 = inlined_call_operand.vmem [shape: f32[1,10], index: 6, kind: input, shape index: {}]
  %s7 = inlined_call_operand.vmem [shape: f32[20,10], index: 7, kind: output, shape index: {}]
  %s8 = sld [smem:[#allocation0]]
  $region117: #{tpu_custom_call.1} parent=0
    _
  %s10 = ssub.s32 1, %s8
  %s11 = scalar_select 0, %s10, %s8
  $region1: #{tpu_custom_call.1} parent=0
    #allocation2 [shape = 'u8[131072]{0}', space=vmem, size = 0x20000, scoped, tag = 'input window, operand 0']
    #allocation3 [shape = 's32[2]{0}', space=sflag, size = 0x8, scoped, tag = 'scoped memory for tpu_custom_call.1']
    #allocation4 [shape = 'u8[32768]{0}', space=vmem, size = 0x8000, scoped, tag = 'input window, operand 3, single buffered']
    #allocation5 [shape = 's32[1]{0}', space=sflag, size = 0x4, scoped, tag = 'scoped memory for tpu_custom_call.1']
    #allocation6 [shape = 'u8[16384]{0}', space=vmem, size = 0x4000, scoped, tag = 'output window, operand 0']
    %12 = vsyncpa [#allocation3], 0
    %s13 = scalar_lea.sflag [#allocation3], 1
    %14 = vsyncpa %s13, 0
    %15 = vsyncpa [#allocation5], 0
    loop: start=0, step=1, limit=4
    $region2: #{tpu_custom_call.1} parent=1 // loop_pre_header
      _
    $region3: #{tpu_custom_call.1} parent=1 // loop_header
      %s17 = sphi 0, %s21
      %p18 = scmp.ge.s32.totalorder %s17, 4
      %s27 = sphi 0, %s29
      %s30 = sphi 0, %s27
      %s31 = sphi 0, %s30
      %s47 = sphi 0, %s31
      %s51 = sphi 0, %s51
      %s53 = sphi 0, %s51
      %s54 = sphi 0, %s53
      %s68 = sphi 0, %s54
      %s72 = sphi 0, %s72
      %s74 = sphi 0, %s72
      %s75 = sphi 0, %s74
      %s89 = sphi 0, %s75
      %s93 = sphi 0, %s93
      %s95 = sphi 0, %s93
      %s96 = sphi 0, %s95
      %s110 = sphi 0, %s96
      %s114 = sphi 0, %s114
      %s116 = sphi 0, %s114
      %s117 = sphi 0, %s116
      %s131 = sphi 0, %s117
      %s135 = sphi 0, %s135
      %s137 = sphi 0, %s135
      %s138 = sphi 0, %s137
      %s152 = sphi 0, %s138
      %s156 = sphi 0, %s156
      %s158 = sphi 0, %s156
      %s159 = sphi 0, %s158
      %s173 = sphi 0, %s159
      %s179 = sphi 0, %s181
      %s182 = sphi 0, %s179
      %s183 = sphi 0, %s182
      %s199 = sphi 0, %s183
    $region4: #{tpu_custom_call.1} parent=1 // loop_header_branch
      %20 = sbr.rel (%p18) target = $region8
    $region5: #{tpu_custom_call.1} parent=1 // loop_body
      %s22 = ssub.s32 %s17, 1
      %s23 = ssub.s32 %s17, 2
      %s24 = sadd.s32 %s17, 1
      %s25 = ssub.s32 %s17, %s24
      %p26 = scmp.eq.s32.totalorder %s25, 0
      %s28 = sadd.s32 %s27, 1
      %s29 = scalar_select %p26, %s27, %s28
      %p32 = pneg %p26
      %p33 = scmp.eq.s32.totalorder %s17, 1
      %p34 = por %p32, %p33
      %p35 = scmp.ne.s32.totalorder %s27, %s30
      %p36 = scmp.eq.s32.totalorder %s17, 0
      %p37 = por %p35, %p36
      %p38 = scmp.ne.s32.totalorder %s27, %s30
      %p39 = scmp.eq.s32.totalorder %s22, 1
      %p40 = por %p38, %p39
      %p41 = scmp.ne.s32.totalorder %s30, %s31
      %p42 = scmp.eq.s32.totalorder %s22, 0
      %p43 = por %p41, %p42
      %p44 = scmp.ne.s32.totalorder %s30, %s31
      %p45 = scmp.eq.s32.totalorder %s23, 1
      %p46 = por %p44, %p45
      %p48 = scmp.ne.s32.totalorder %s31, %s47
      %p49 = scmp.eq.s32.totalorder %s23, 0
      %p50 = por %p48, %p49
      %s52 = sadd.s32 %s51, 1
      %p55 = scmp.eq.s32.totalorder %s17, 1
      %p56 = scmp.ne.s32.totalorder %s51, %s53
      %p57 = scmp.eq.s32.totalorder %s17, 0
      %p58 = por %p56, %p57
      %p59 = scmp.ne.s32.totalorder %s51, %s53
      %p60 = scmp.eq.s32.totalorder %s22, 1
      %p61 = por %p59, %p60
      %p62 = scmp.ne.s32.totalorder %s53, %s54
      %p63 = scmp.eq.s32.totalorder %s22, 0
      %p64 = por %p62, %p63
      %p65 = scmp.ne.s32.totalorder %s53, %s54
      %p66 = scmp.eq.s32.totalorder %s23, 1
      %p67 = por %p65, %p66
      %p69 = scmp.ne.s32.totalorder %s54, %s68
      %p70 = scmp.eq.s32.totalorder %s23, 0
      %p71 = por %p69, %p70
      %s73 = sadd.s32 %s72, 1
      %p76 = scmp.eq.s32.totalorder %s17, 1
      %p77 = scmp.ne.s32.totalorder %s72, %s74
      %p78 = scmp.eq.s32.totalorder %s17, 0
      %p79 = por %p77, %p78
      %p80 = scmp.ne.s32.totalorder %s72, %s74
      %p81 = scmp.eq.s32.totalorder %s22, 1
      %p82 = por %p80, %p81
      %p83 = scmp.ne.s32.totalorder %s74, %s75
      %p84 = scmp.eq.s32.totalorder %s22, 0
      %p85 = por %p83, %p84
      %p86 = scmp.ne.s32.totalorder %s74, %s75
      %p87 = scmp.eq.s32.totalorder %s23, 1
      %p88 = por %p86, %p87
      %p90 = scmp.ne.s32.totalorder %s75, %s89
      %p91 = scmp.eq.s32.totalorder %s23, 0
      %p92 = por %p90, %p91
      %s94 = sadd.s32 %s93, 1
      %p97 = scmp.eq.s32.totalorder %s17, 1
      %p98 = scmp.ne.s32.totalorder %s93, %s95
      %p99 = scmp.eq.s32.totalorder %s17, 0
      %p100 = por %p98, %p99
      %p101 = scmp.ne.s32.totalorder %s93, %s95
      %p102 = scmp.eq.s32.totalorder %s22, 1
      %p103 = por %p101, %p102
      %p104 = scmp.ne.s32.totalorder %s95, %s96
      %p105 = scmp.eq.s32.totalorder %s22, 0
      %p106 = por %p104, %p105
      %p107 = scmp.ne.s32.totalorder %s95, %s96
      %p108 = scmp.eq.s32.totalorder %s23, 1
      %p109 = por %p107, %p108
      %p111 = scmp.ne.s32.totalorder %s96, %s110
      %p112 = scmp.eq.s32.totalorder %s23, 0
      %p113 = por %p111, %p112
      %s115 = sadd.s32 %s114, 1
      %p118 = scmp.eq.s32.totalorder %s17, 1
      %p119 = scmp.ne.s32.totalorder %s114, %s116
      %p120 = scmp.eq.s32.totalorder %s17, 0
      %p121 = por %p119, %p120
      %p122 = scmp.ne.s32.totalorder %s114, %s116
      %p123 = scmp.eq.s32.totalorder %s22, 1
      %p124 = por %p122, %p123
      %p125 = scmp.ne.s32.totalorder %s116, %s117
      %p126 = scmp.eq.s32.totalorder %s22, 0
      %p127 = por %p125, %p126
      %p128 = scmp.ne.s32.totalorder %s116, %s117
      %p129 = scmp.eq.s32.totalorder %s23, 1
      %p130 = por %p128, %p129
      %p132 = scmp.ne.s32.totalorder %s117, %s131
      %p133 = scmp.eq.s32.totalorder %s23, 0
      %p134 = por %p132, %p133
      %s136 = sadd.s32 %s135, 1
      %p139 = scmp.eq.s32.totalorder %s17, 1
      %p140 = scmp.ne.s32.totalorder %s135, %s137
      %p141 = scmp.eq.s32.totalorder %s17, 0
      %p142 = por %p140, %p141
      %p143 = scmp.ne.s32.totalorder %s135, %s137
      %p144 = scmp.eq.s32.totalorder %s22, 1
      %p145 = por %p143, %p144
      %p146 = scmp.ne.s32.totalorder %s137, %s138
      %p147 = scmp.eq.s32.totalorder %s22, 0
      %p148 = por %p146, %p147
      %p149 = scmp.ne.s32.totalorder %s137, %s138
      %p150 = scmp.eq.s32.totalorder %s23, 1
      %p151 = por %p149, %p150
      %p153 = scmp.ne.s32.totalorder %s138, %s152
      %p154 = scmp.eq.s32.totalorder %s23, 0
      %p155 = por %p153, %p154
      %s157 = sadd.s32 %s156, 1
      %p160 = scmp.eq.s32.totalorder %s17, 1
      %p161 = scmp.ne.s32.totalorder %s156, %s158
      %p162 = scmp.eq.s32.totalorder %s17, 0
      %p163 = por %p161, %p162
      %p164 = scmp.ne.s32.totalorder %s156, %s158
      %p165 = scmp.eq.s32.totalorder %s22, 1
      %p166 = por %p164, %p165
      %p167 = scmp.ne.s32.totalorder %s158, %s159
      %p168 = scmp.eq.s32.totalorder %s22, 0
      %p169 = por %p167, %p168
      %p170 = scmp.ne.s32.totalorder %s158, %s159
      %p171 = scmp.eq.s32.totalorder %s23, 1
      %p172 = por %p170, %p171
      %p174 = scmp.ne.s32.totalorder %s159, %s173
      %p175 = scmp.eq.s32.totalorder %s23, 0
      %p176 = por %p174, %p175
      %s177 = ssub.s32 %s17, %s24
      %p178 = scmp.eq.s32.totalorder %s177, 0
      %s180 = sadd.s32 %s179, 1
      %s181 = scalar_select %p178, %s179, %s180
      %p184 = pneg %p178
      %p185 = scmp.eq.s32.totalorder %s17, 1
      %p186 = por %p184, %p185
      %p187 = scmp.ne.s32.totalorder %s179, %s182
      %p188 = scmp.eq.s32.totalorder %s17, 0
      %p189 = por %p187, %p188
      %p190 = scmp.ne.s32.totalorder %s179, %s182
      %p191 = scmp.eq.s32.totalorder %s22, 1
      %p192 = por %p190, %p191
      %p193 = scmp.ne.s32.totalorder %s182, %s183
      %p194 = scmp.eq.s32.totalorder %s22, 0
      %p195 = por %p193, %p194
      %p196 = scmp.ne.s32.totalorder %s182, %s183
      %p197 = scmp.eq.s32.totalorder %s23, 1
      %p198 = por %p196, %p197
      %p200 = scmp.ne.s32.totalorder %s183, %s199
      %p201 = scmp.eq.s32.totalorder %s23, 0
      %p202 = por %p200, %p201
      %p203 = scmp.le.s32.totalorder 1, %s17
      %p204 = scmp.lt.s32.totalorder %s17, 3
      %p205 = pnand %p203, %p204
      %p206 = pneg %p205
      // Predicated region
      $region9: #{tpu_custom_call.1} parent=5 // pred_check
        _
      $region10: #{tpu_custom_call.1} parent=5 // pred_check_branch
        %208 = sbr.rel (%p205) target = $region12
      $region11: #{tpu_custom_call.1} parent=5 // pred_region
        %s209 = ssub.s32 %s17, 1
        // Predicated region
        $region13: #{tpu_custom_call.1} parent=11 // pred_check
          %p210 = pneg %p64
        $region14: #{tpu_custom_call.1} parent=11 // pred_check_branch
          %212 = sbr.rel (%p210) target = $region16
        $region15: #{tpu_custom_call.1} parent=11 // pred_region
          _
        $region16: #{tpu_custom_call.1} parent=11 // pred_fallthru
          _
        // Predicated region
        $region17: #{tpu_custom_call.1} parent=11 // pred_check
          %p213 = pneg %p85
        $region18: #{tpu_custom_call.1} parent=11 // pred_check_branch
          %215 = sbr.rel (%p213) target = $region20
        $region19: #{tpu_custom_call.1} parent=11 // pred_region
          _
        $region20: #{tpu_custom_call.1} parent=11 // pred_fallthru
          _
        // Predicated region
        $region21: #{tpu_custom_call.1} parent=11 // pred_check
          %p216 = pneg %p106
        $region22: #{tpu_custom_call.1} parent=11 // pred_check_branch
          %218 = sbr.rel (%p216) target = $region24
        $region23: #{tpu_custom_call.1} parent=11 // pred_region
          %s220 = ssub.s32 1024, 1024
          %221 = vsyncadd [#allocation5], %s220
          %s222 = sshll.u32 [#allocation4], 4
          %s223 = int_to_ptr.vmem [resolvable:$true] %s222
          %228 = dma.hbm_to_vmem [thread:$0]  %s3, 1024, %s223, [#allocation5], 64, 64, 4
        $region24: #{tpu_custom_call.1} parent=11 // pred_fallthru
          _
        // Predicated region
        $region25: #{tpu_custom_call.1} parent=11 // pred_check
          %p229 = pneg %p127
        $region26: #{tpu_custom_call.1} parent=11 // pred_check_branch
          %231 = sbr.rel (%p229) target = $region28
        $region27: #{tpu_custom_call.1} parent=11 // pred_region
          _
        $region28: #{tpu_custom_call.1} parent=11 // pred_fallthru
          _
        // Predicated region
        $region29: #{tpu_custom_call.1} parent=11 // pred_check
          %p232 = pneg %p148
        $region30: #{tpu_custom_call.1} parent=11 // pred_check_branch
          %234 = sbr.rel (%p232) target = $region32
        $region31: #{tpu_custom_call.1} parent=11 // pred_region
          _
        $region32: #{tpu_custom_call.1} parent=11 // pred_fallthru
          _
        // Predicated region
        $region33: #{tpu_custom_call.1} parent=11 // pred_check
          %p235 = pneg %p169
        $region34: #{tpu_custom_call.1} parent=11 // pred_check_branch
          %237 = sbr.rel (%p235) target = $region36
        $region35: #{tpu_custom_call.1} parent=11 // pred_region
          _
        $region36: #{tpu_custom_call.1} parent=11 // pred_fallthru
          _
      $region12: #{tpu_custom_call.1} parent=5 // pred_fallthru
        _
      %p238 = scmp.lt.s32.totalorder %s17, 2
      // Predicated region
      $region37: #{tpu_custom_call.1} parent=5 // pred_check
        %p239 = pneg %p238
      $region38: #{tpu_custom_call.1} parent=5 // pred_check_branch
        %241 = sbr.rel (%p239) target = $region40
      $region39: #{tpu_custom_call.1} parent=5 // pred_region
        // Predicated region
        $region41: #{tpu_custom_call.1} parent=39 // pred_check
          %p242 = pneg %p37
        $region42: #{tpu_custom_call.1} parent=39 // pred_check_branch
          %244 = sbr.rel (%p242) target = $region44
        $region43: #{tpu_custom_call.1} parent=39 // pred_region
          %s245 = sand.u32 %s27, 1
          %s246 = scalar_lea.sflag [#allocation3], %s245
          %s247 = sand.u32 %s27, 1
          %s248 = smul.addr %s247, 128
          %s249 = scalar_lea.vmem [#allocation2], %s248
          %s250 = smul.u32 16, %s17
          %s251 = ssub.s32 20, %s250
          %p252 = scmp.lt.s32.totalorder %s251, 16
          %s253 = scalar_select %p252, %s251, 16
          %s254 = smul.u32 128, %s253
          %s256 = ssub.s32 2048, %s254
          %257 = vsyncadd %s246, %s256
          %p258 = scmp.ne.s32.totalorder 0, %s254
          %s259 = smul.addr %s250, 128
          %s260 = scalar_lea.hbm %s0, %s259
          %s261 = smul.u32 8, %s253
          %s262 = sshll.u32 %s249, 4
          %s263 = int_to_ptr.vmem [resolvable:$true] %s262
          %s264 = sshll.u32 %s261, 4
          %268 = dma.hbm_to_vmem [thread:$0]  (%p258), %s260, %s264, %s263, %s246, 128, 128, 8
        $region44: #{tpu_custom_call.1} parent=39 // pred_fallthru
          _
      $region40: #{tpu_custom_call.1} parent=5 // pred_fallthru
        _
      %p269 = scmp.le.s32.totalorder 1, %s17
      %p270 = scmp.lt.s32.totalorder %s17, 3
      %p271 = pnand %p269, %p270
      %p272 = pneg %p271
      // Predicated region
      $region45: #{tpu_custom_call.1} parent=5 // pred_check
        _
      $region46: #{tpu_custom_call.1} parent=5 // pred_check_branch
        %274 = sbr.rel (%p271) target = $region48
      $region47: #{tpu_custom_call.1} parent=5 // pred_region
        %s275 = ssub.s32 %s17, 1
        %s276 = sand.u32 %s30, 1
        %s277 = scalar_lea.sflag [#allocation3], %s276
        %s278 = sand.u32 %s30, 1
        %s279 = smul.addr %s278, 128
        %s280 = scalar_lea.vmem [#allocation2], %s279
        // Predicated region
        $region49: #{tpu_custom_call.1} parent=47 // pred_check
          %p281 = pneg %p43
        $region50: #{tpu_custom_call.1} parent=47 // pred_check_branch
          %283 = sbr.rel (%p281) target = $region52
        $region51: #{tpu_custom_call.1} parent=47 // pred_region
          %284 = dma.done %s277, 2048
        $region52: #{tpu_custom_call.1} parent=47 // pred_fallthru
          _
        // Predicated region
        $region53: #{tpu_custom_call.1} parent=47 // pred_check
          %p285 = pneg %p106
        $region54: #{tpu_custom_call.1} parent=47 // pred_check_branch
          %287 = sbr.rel (%p285) target = $region56
        $region55: #{tpu_custom_call.1} parent=47 // pred_region
          %288 = dma.done [#allocation5], 1024
        $region56: #{tpu_custom_call.1} parent=47 // pred_fallthru
          _
        %s289 = sand.u32 %s30, 1
        %s290 = scalar_lea.sflag [#allocation3], %s289
        %s291 = sand.u32 %s30, 1
        %s292 = smul.addr %s291, 128
        %s293 = scalar_lea.vmem [#allocation2], %s292
        %p294 = pneg %p43
        %p295 = pneg %p40
        %p296 = pneg %p64
        %p297 = pneg %p61
        %p298 = pneg %p85
        %p299 = pneg %p82
        %p300 = pneg %p106
        %p301 = pneg %p103
        %p302 = pneg %p127
        %p303 = pneg %p124
        %p304 = pneg %p148
        %p305 = pneg %p145
        %p306 = pneg %p169
        %p307 = pneg %p166
        %p308 = pneg %p195
        %p309 = pneg %p192
        %s310 = sand.u32 %s182, 1
        %s311 = sand.u32 %s182, 1
        %s312 = smul.addr %s311, 16
        %s313 = scalar_lea.vmem [#allocation6], %s312
        %s314 = smul.u32 16, %s22
        %s315 = ssub.s32 20, %s314
        %p316 = scmp.lt.s32.totalorder %s315, 16
        %s317 = scalar_select %p316, %s315, 16
        %s318 = smul.u32 128, %s317
        %s319 = smul.u32 2, %s22
        %s320 = ssub.s32 3, %s319
        %p321 = scmp.lt.s32.totalorder %s320, 2
        %s322 = scalar_select %p321, %s320, 2
        %s323 = smul.u32 128, %s322
        %v325 = vld [vmem:[%s280] sm:$0xff]
        %v326 = vld [vmem:[%s280 + $0x8] sm:$0xff]
        %v327 = vld [vmem:[%s280 + $0x10] sm:$0xff]
        %v328 = vld [vmem:[%s280 + $0x18] sm:$0xff]
        %v329 = vld [vmem:[%s280 + $0x20] sm:$0xff]
        %v330 = vld [vmem:[%s280 + $0x28] sm:$0xff]
        %v331 = vld [vmem:[%s280 + $0x30] sm:$0xff]
        %v332 = vld [vmem:[%s280 + $0x38] sm:$0xff]
        %v333 = vld [vmem:[%s280 + $0x40] sm:$0xff]
        %v334 = vld [vmem:[%s280 + $0x48] sm:$0xff]
        %v335 = vld [vmem:[%s280 + $0x50] sm:$0xff]
        %v336 = vld [vmem:[%s280 + $0x58] sm:$0xff]
        %v337 = vld [vmem:[%s280 + $0x60] sm:$0xff]
        %v338 = vld [vmem:[%s280 + $0x68] sm:$0xff]
        %v339 = vld [vmem:[%s280 + $0x70] sm:$0xff]
        %v340 = vld [vmem:[%s280 + $0x78] sm:$0xff]
        %v341 = vrot.slane %v325, 4
        %v342 = vadd.f32 %v325, %v341
        %v343 = vrot.slane %v342, 2
        %v344 = vadd.f32 %v342, %v343
        %v345 = vrot.slane %v344, 1
        %v346 = vadd.f32 %v344, %v345
        %v347 = vrot.slane %v326, 4
        %v348 = vadd.f32 %v326, %v347
        %v349 = vrot.slane %v348, 2
        %v350 = vadd.f32 %v348, %v349
        %v351 = vrot.slane %v350, 1
        %v352 = vadd.f32 %v350, %v351
        %v353 = vrot.slane %v327, 4
        %v354 = vadd.f32 %v327, %v353
        %v355 = vrot.slane %v354, 2
        %v356 = vadd.f32 %v354, %v355
        %v357 = vrot.slane %v356, 1
        %v358 = vadd.f32 %v356, %v357
        %v359 = vrot.slane %v328, 4
        %v360 = vadd.f32 %v328, %v359
        %v361 = vrot.slane %v360, 2
        %v362 = vadd.f32 %v360, %v361
        %v363 = vrot.slane %v362, 1
        %v364 = vadd.f32 %v362, %v363
        %v365 = vrot.slane %v329, 4
        %v366 = vadd.f32 %v329, %v365
        %v367 = vrot.slane %v366, 2
        %v368 = vadd.f32 %v366, %v367
        %v369 = vrot.slane %v368, 1
        %v370 = vadd.f32 %v368, %v369
        %v371 = vrot.slane %v330, 4
        %v372 = vadd.f32 %v330, %v371
        %v373 = vrot.slane %v372, 2
        %v374 = vadd.f32 %v372, %v373
        %v375 = vrot.slane %v374, 1
        %v376 = vadd.f32 %v374, %v375
        %v377 = vrot.slane %v331, 4
        %v378 = vadd.f32 %v331, %v377
        %v379 = vrot.slane %v378, 2
        %v380 = vadd.f32 %v378, %v379
        %v381 = vrot.slane %v380, 1
        %v382 = vadd.f32 %v380, %v381
        %v383 = vrot.slane %v332, 4
        %v384 = vadd.f32 %v332, %v383
        %v385 = vrot.slane %v384, 2
        %v386 = vadd.f32 %v384, %v385
        %v387 = vrot.slane %v386, 1
        %v388 = vadd.f32 %v386, %v387
        %v389 = vrot.slane %v333, 4
        %v390 = vadd.f32 %v333, %v389
        %v391 = vrot.slane %v390, 2
        %v392 = vadd.f32 %v390, %v391
        %v393 = vrot.slane %v392, 1
        %v394 = vadd.f32 %v392, %v393
        %v395 = vrot.slane %v334, 4
        %v396 = vadd.f32 %v334, %v395
        %v397 = vrot.slane %v396, 2
        %v398 = vadd.f32 %v396, %v397
        %v399 = vrot.slane %v398, 1
        %v400 = vadd.f32 %v398, %v399
        %v401 = vrot.slane %v335, 4
        %v402 = vadd.f32 %v335, %v401
        %v403 = vrot.slane %v402, 2
        %v404 = vadd.f32 %v402, %v403
        %v405 = vrot.slane %v404, 1
        %v406 = vadd.f32 %v404, %v405
        %v407 = vrot.slane %v336, 4
        %v408 = vadd.f32 %v336, %v407
        %v409 = vrot.slane %v408, 2
        %v410 = vadd.f32 %v408, %v409
        %v411 = vrot.slane %v410, 1
        %v412 = vadd.f32 %v410, %v411
        %v413 = vrot.slane %v337, 4
        %v414 = vadd.f32 %v337, %v413
        %v415 = vrot.slane %v414, 2
        %v416 = vadd.f32 %v414, %v415
        %v417 = vrot.slane %v416, 1
        %v418 = vadd.f32 %v416, %v417
        %v419 = vrot.slane %v338, 4
        %v420 = vadd.f32 %v338, %v419
        %v421 = vrot.slane %v420, 2
        %v422 = vadd.f32 %v420, %v421
        %v423 = vrot.slane %v422, 1
        %v424 = vadd.f32 %v422, %v423
        %v425 = vrot.slane %v339, 4
        %v426 = vadd.f32 %v339, %v425
        %v427 = vrot.slane %v426, 2
        %v428 = vadd.f32 %v426, %v427
        %v429 = vrot.slane %v428, 1
        %v430 = vadd.f32 %v428, %v429
        %v431 = vrot.slane %v340, 4
        %v432 = vadd.f32 %v340, %v431
        %v433 = vrot.slane %v432, 2
        %v434 = vadd.f32 %v432, %v433
        %v435 = vrot.slane %v434, 1
        %v436 = vadd.f32 %v434, %v435
        %v437 = vmul.f32 %v346, 0.125
        %v438 = vmul.f32 %v352, 0.125
        %v439 = vmul.f32 %v358, 0.125
        %v440 = vmul.f32 %v364, 0.125
        %v441 = vmul.f32 %v370, 0.125
        %v442 = vmul.f32 %v376, 0.125
        %v443 = vmul.f32 %v382, 0.125
        %v444 = vmul.f32 %v388, 0.125
        %v445 = vmul.f32 %v394, 0.125
        %v446 = vmul.f32 %v400, 0.125
        %v447 = vmul.f32 %v406, 0.125
        %v448 = vmul.f32 %v412, 0.125
        %v449 = vmul.f32 %v418, 0.125
        %v450 = vmul.f32 %v424, 0.125
        %v451 = vmul.f32 %v430, 0.125
        %v452 = vmul.f32 %v436, 0.125
        %v453 = vpack.c.bf16 %v437, %v437
        %v454 = vpack.c.bf16 %v438, %v438
        %v455 = vpack.c.bf16 %v439, %v439
        %v456 = vpack.c.bf16 %v440, %v440
        %v457 = vpack.c.bf16 %v441, %v441
        %v458 = vpack.c.bf16 %v442, %v442
        %v459 = vpack.c.bf16 %v443, %v443
        %v460 = vpack.c.bf16 %v444, %v444
        %v461 = vpack.c.bf16 %v445, %v445
        %v462 = vpack.c.bf16 %v446, %v446
        %v463 = vpack.c.bf16 %v447, %v447
        %v464 = vpack.c.bf16 %v448, %v448
        %v465 = vpack.c.bf16 %v449, %v449
        %v466 = vpack.c.bf16 %v450, %v450
        %v467 = vpack.c.bf16 %v451, %v451
        %v468 = vpack.c.bf16 %v452, %v452
        %v469 = vld [vmem:[%s1] sm:$0xf]
        %v470 = vld [vmem:[%s1 + $0x4] sm:$0xf]
        %v471 = vld [vmem:[%s1 + $0x8] sm:$0xf]
        %v472 = vld [vmem:[%s1 + $0xc] sm:$0xf]
        %v473 = vld [vmem:[%s1 + $0x10] sm:$0xf]
        %v474 = vld [vmem:[%s1 + $0x14] sm:$0xf]
        %v475 = vld [vmem:[%s1 + $0x18] sm:$0xf]
        %v476 = vld [vmem:[%s1 + $0x1c] sm:$0xf]
        %v477 = vld [vmem:[%s1 + $0x20] sm:$0xf]
        %v478 = vld [vmem:[%s1 + $0x24] sm:$0xf]
        %v479 = vld [vmem:[%s1 + $0x28] sm:$0xf]
        %v480 = vld [vmem:[%s1 + $0x2c] sm:$0xf]
        %v481 = vld [vmem:[%s1 + $0x30] sm:$0xf]
        %v482 = vld [vmem:[%s1 + $0x34] sm:$0xf]
        %v483 = vld [vmem:[%s1 + $0x38] sm:$0xf]
        %v484 = vld [vmem:[%s1 + $0x3c] sm:$0xf]
        %v485 = vld [vmem:[%s2] sm:$0x1]
        %v487 = vlaneseq
        %v488 = vshrl.u32 %v487, 7
        %v489 = vsub.s32 0, %v488
        %v490 = vrot.slane %v485, %v489
        %v508 = vunpack.c.l.b16 %v453
        %v509 = vunpack.c.l.b16 %v454
        %v510 = vunpack.c.l.b16 %v455
        %v511 = vunpack.c.l.b16 %v456
        %v512 = vunpack.c.l.b16 %v457
        %v513 = vunpack.c.l.b16 %v458
        %v514 = vunpack.c.l.b16 %v459
        %v515 = vunpack.c.l.b16 %v460
        %v516 = vunpack.c.l.b16 %v461
        %v517 = vunpack.c.l.b16 %v462
        %v518 = vunpack.c.l.b16 %v463
        %v519 = vunpack.c.l.b16 %v464
        %v520 = vunpack.c.l.b16 %v465
        %v521 = vunpack.c.l.b16 %v466
        %v522 = vunpack.c.l.b16 %v467
        %v523 = vunpack.c.l.b16 %v468
        %vm524 = vcmask 1041409
        %v525 = vsel %vm524, %v509, %v508
        %vm526 = vcmask 1042434
        %v527 = vsel %vm526, %v510, %v525
        %vm528 = vcmask 1043459
        %v529 = vsel %vm528, %v511, %v527
        %vm530 = vcmask 1044484
        %v531 = vsel %vm530, %v512, %v529
        %vm532 = vcmask 1045509
        %v533 = vsel %vm532, %v513, %v531
        %vm534 = vcmask 1046534
        %v535 = vsel %vm534, %v514, %v533
        %vm536 = vcmask 1047559
        %v537 = vsel %vm536, %v515, %v535
        %v538 = vsel %vm524, %v517, %v516
        %v539 = vsel %vm526, %v518, %v538
        %v540 = vsel %vm528, %v519, %v539
        %v541 = vsel %vm530, %v520, %v540
        %v542 = vsel %vm532, %v521, %v541
        %v543 = vsel %vm534, %v522, %v542
        %v544 = vsel %vm536, %v523, %v543
        %v545 = vpack.c.b16 %v544, %v537
        %v563 = vunpack.c.l.b16 %v469
        %v564 = vunpack.c.l.b16 %v470
        %v565 = vunpack.c.l.b16 %v471
        %v566 = vunpack.c.l.b16 %v472
        %v567 = vunpack.c.l.b16 %v473
        %v568 = vunpack.c.l.b16 %v474
        %v569 = vunpack.c.l.b16 %v475
        %v570 = vunpack.c.l.b16 %v476
        %v571 = vunpack.c.l.b16 %v477
        %v572 = vunpack.c.l.b16 %v478
        %v573 = vunpack.c.l.b16 %v479
        %v574 = vunpack.c.l.b16 %v480
        %v575 = vunpack.c.l.b16 %v481
        %v576 = vunpack.c.l.b16 %v482
        %v577 = vunpack.c.l.b16 %v483
        %v578 = vunpack.c.l.b16 %v484
        %v579 = vpack.c.b16 %v564, %v563
        %v580 = vpack.c.b16 %v566, %v565
        %v581 = vpack.c.b16 %v568, %v567
        %v582 = vpack.c.b16 %v570, %v569
        %v583 = vpack.c.b16 %v572, %v571
        %v584 = vpack.c.b16 %v574, %v573
        %v585 = vpack.c.b16 %v576, %v575
        %v586 = vpack.c.b16 %v578, %v577
        %595 = vmatprep.subr.bf16.mxu0 0
        %596 = vmatpush1.bf16.msra.mxu0 %v586
        %597 = vmatprep.subr.bf16.mxu0 0
        %598 = vmatpush1.bf16.msra.mxu0 %v585
        %599 = vmatprep.subr.bf16.mxu0 0
        %600 = vmatpush1.bf16.msra.mxu0 %v584
        %601 = vmatprep.subr.bf16.mxu0 0
        %602 = vmatpush1.bf16.msra.mxu0 %v583
        %603 = vmatprep.subr.bf16.mxu0 0
        %604 = vmatpush1.bf16.msra.mxu0 %v582
        %605 = vmatprep.subr.bf16.mxu0 0
        %606 = vmatpush1.bf16.msra.mxu0 %v581
        %607 = vmatprep.subr.bf16.mxu0 0
        %608 = vmatpush1.bf16.msra.mxu0 %v580
        %609 = vmatprep.subr.bf16.mxu0 0
        %610 = vmatpush1.bf16.msra.mxu0 %v579
        %611 = vmatprep.subr.bf16.mxu0 0
        %612 = vmatpush2.bf16.msra.mxu0 0
        %613 = vmatprep.subr.bf16.mxu0 0
        %614 = vmatpush2.bf16.msra.mxu0 0
        %615 = vmatprep.subr.bf16.mxu0 0
        %616 = vmatpush2.bf16.msra.mxu0 0
        %617 = vmatprep.subr.bf16.mxu0 0
        %618 = vmatpush2.bf16.msra.mxu0 0
        %619 = vmatprep.subr.bf16.mxu0 0
        %620 = vmatpush2.bf16.msra.mxu0 0
        %621 = vmatprep.subr.bf16.mxu0 0
        %622 = vmatpush2.bf16.msra.mxu0 0
        %623 = vmatprep.subr.bf16.mxu0 0
        %624 = vmatpush2.bf16.msra.mxu0 0
        %625 = vmatprep.subr.bf16.mxu0 0
        %626 = vmatpush2.bf16.msra.mxu0 0
        %627 = vmatprep.mubr.bf16.mxu0 0
        %628 = vmatmul.mubr.bf16.gmra.mxu0 %v545
        %v629 = vpop.f32.mrf.mxu0
        %v630 = vadd.f32 %v490, %v629
        %v631 = vpop.f32.mrf.mxu0
        %v632 = vpop.f32.mrf.mxu0
        %v633 = vadd.f32 %v490, %v632
        %v634 = vpop.f32.mrf.mxu0
        %635 = vdwg.mxu0
        %v636 = vmax.f32 %v630, 0.0
        %v637 = vmax.f32 %v633, 0.0
        %v638 = vpack.c.bf16 %v637, %v636
        %v639 = vld [vmem:[#allocation4] sm:$0xf]
        %v640 = vld [vmem:[#allocation4 + $0x4] sm:$0xf]
        %v641 = vld [vmem:[#allocation4 + $0x8] sm:$0xf]
        %v642 = vld [vmem:[#allocation4 + $0xc] sm:$0xf]
        %v643 = vld [vmem:[#allocation4 + $0x10] sm:$0xf]
        %v644 = vld [vmem:[#allocation4 + $0x14] sm:$0xf]
        %v645 = vld [vmem:[#allocation4 + $0x18] sm:$0xf]
        %v646 = vld [vmem:[#allocation4 + $0x1c] sm:$0xf]
        %v647 = vld [vmem:[#allocation4 + $0x20] sm:$0xf]
        %v648 = vld [vmem:[#allocation4 + $0x24] sm:$0xf]
        %v649 = vld [vmem:[#allocation4 + $0x28] sm:$0xf]
        %v650 = vld [vmem:[#allocation4 + $0x2c] sm:$0xf]
        %v651 = vld [vmem:[#allocation4 + $0x30] sm:$0xf]
        %v652 = vld [vmem:[#allocation4 + $0x34] sm:$0xf]
        %v653 = vld [vmem:[#allocation4 + $0x38] sm:$0xf]
        %v654 = vld [vmem:[#allocation4 + $0x3c] sm:$0xf]
        %v655 = vld [vmem:[%s4] sm:$0x1]
        %v657 = vlaneseq
        %v658 = vshrl.u32 %v657, 7
        %v659 = vsub.s32 0, %v658
        %v660 = vrot.slane %v655, %v659
        %v678 = vunpack.c.l.b16 %v639
        %v679 = vunpack.c.l.b16 %v640
        %v680 = vunpack.c.l.b16 %v641
        %v681 = vunpack.c.l.b16 %v642
        %v682 = vunpack.c.l.b16 %v643
        %v683 = vunpack.c.l.b16 %v644
        %v684 = vunpack.c.l.b16 %v645
        %v685 = vunpack.c.l.b16 %v646
        %v686 = vunpack.c.l.b16 %v647
        %v687 = vunpack.c.l.b16 %v648
        %v688 = vunpack.c.l.b16 %v649
        %v689 = vunpack.c.l.b16 %v650
        %v690 = vunpack.c.l.b16 %v651
        %v691 = vunpack.c.l.b16 %v652
        %v692 = vunpack.c.l.b16 %v653
        %v693 = vunpack.c.l.b16 %v654
        %v694 = vpack.c.b16 %v679, %v678
        %v695 = vpack.c.b16 %v681, %v680
        %v696 = vpack.c.b16 %v683, %v682
        %v697 = vpack.c.b16 %v685, %v684
        %v698 = vpack.c.b16 %v687, %v686
        %v699 = vpack.c.b16 %v689, %v688
        %v700 = vpack.c.b16 %v691, %v690
        %v701 = vpack.c.b16 %v693, %v692
        %710 = vmatprep.subr.bf16.mxu0 0
        %711 = vmatpush1.bf16.msra.mxu0 %v701
        %712 = vmatprep.subr.bf16.mxu0 0
        %713 = vmatpush1.bf16.msra.mxu0 %v700
        %714 = vmatprep.subr.bf16.mxu0 0
        %715 = vmatpush1.bf16.msra.mxu0 %v699
        %716 = vmatprep.subr.bf16.mxu0 0
        %717 = vmatpush1.bf16.msra.mxu0 %v698
        %718 = vmatprep.subr.bf16.mxu0 0
        %719 = vmatpush1.bf16.msra.mxu0 %v697
        %720 = vmatprep.subr.bf16.mxu0 0
        %721 = vmatpush1.bf16.msra.mxu0 %v696
        %722 = vmatprep.subr.bf16.mxu0 0
        %723 = vmatpush1.bf16.msra.mxu0 %v695
        %724 = vmatprep.subr.bf16.mxu0 0
        %725 = vmatpush1.bf16.msra.mxu0 %v694
        %726 = vmatprep.subr.bf16.mxu0 0
        %727 = vmatpush2.bf16.msra.mxu0 0
        %728 = vmatprep.subr.bf16.mxu0 0
        %729 = vmatpush2.bf16.msra.mxu0 0
        %730 = vmatprep.subr.bf16.mxu0 0
        %731 = vmatpush2.bf16.msra.mxu0 0
        %732 = vmatprep.subr.bf16.mxu0 0
        %733 = vmatpush2.bf16.msra.mxu0 0
        %734 = vmatprep.subr.bf16.mxu0 0
        %735 = vmatpush2.bf16.msra.mxu0 0
        %736 = vmatprep.subr.bf16.mxu0 0
        %737 = vmatpush2.bf16.msra.mxu0 0
        %738 = vmatprep.subr.bf16.mxu0 0
        %739 = vmatpush2.bf16.msra.mxu0 0
        %740 = vmatprep.subr.bf16.mxu0 0
        %741 = vmatpush2.bf16.msra.mxu0 0
        %742 = vmatprep.mubr.bf16.mxu0 0
        %743 = vmatmul.mubr.bf16.gmra.mxu0 %v638
        %v744 = vpop.f32.mrf.mxu0
        %v745 = vadd.f32 %v660, %v744
        %v746 = vpop.f32.mrf.mxu0
        %v747 = vpop.f32.mrf.mxu0
        %v748 = vadd.f32 %v660, %v747
        %v749 = vpop.f32.mrf.mxu0
        %750 = vdwg.mxu0
        %v751 = vmax.f32 %v745, 0.0
        %v752 = vmax.f32 %v748, 0.0
        %v753 = vpack.c.bf16 %v752, %v751
        %v754 = vld [vmem:[%s5] sm:$0xf]
        %v755 = vld [vmem:[%s5 + $0x4] sm:$0xf]
        %v756 = vld [vmem:[%s5 + $0x8] sm:$0xf]
        %v757 = vld [vmem:[%s5 + $0xc] sm:$0xf]
        %v758 = vld [vmem:[%s5 + $0x10] sm:$0xf]
        %v759 = vld [vmem:[%s5 + $0x14] sm:$0xf]
        %v760 = vld [vmem:[%s5 + $0x18] sm:$0xf]
        %v761 = vld [vmem:[%s5 + $0x1c] sm:$0xf]
        %v762 = vld [vmem:[%s5 + $0x20] sm:$0xf]
        %v763 = vld [vmem:[%s5 + $0x24] sm:$0xf]
        %v764 = vld [vmem:[%s5 + $0x28] sm:$0xf]
        %v765 = vld [vmem:[%s5 + $0x2c] sm:$0xf]
        %v766 = vld [vmem:[%s5 + $0x30] sm:$0xf]
        %v767 = vld [vmem:[%s5 + $0x34] sm:$0xf]
        %v768 = vld [vmem:[%s5 + $0x38] sm:$0xf]
        %v769 = vld [vmem:[%s5 + $0x3c] sm:$0xf]
        %v770 = vld [vmem:[%s6] sm:$0x1]
        %v772 = vlaneseq
        %v773 = vshrl.u32 %v772, 7
        %v774 = vsub.s32 0, %v773
        %v775 = vrot.slane %v770, %v774
        %v793 = vunpack.c.l.b16 %v754
        %v794 = vunpack.c.l.b16 %v755
        %v795 = vunpack.c.l.b16 %v756
        %v796 = vunpack.c.l.b16 %v757
        %v797 = vunpack.c.l.b16 %v758
        %v798 = vunpack.c.l.b16 %v759
        %v799 = vunpack.c.l.b16 %v760
        %v800 = vunpack.c.l.b16 %v761
        %v801 = vunpack.c.l.b16 %v762
        %v802 = vunpack.c.l.b16 %v763
        %v803 = vunpack.c.l.b16 %v764
        %v804 = vunpack.c.l.b16 %v765
        %v805 = vunpack.c.l.b16 %v766
        %v806 = vunpack.c.l.b16 %v767
        %v807 = vunpack.c.l.b16 %v768
        %v808 = vunpack.c.l.b16 %v769
        %v809 = vpack.c.b16 %v794, %v793
        %v810 = vpack.c.b16 %v796, %v795
        %v811 = vpack.c.b16 %v798, %v797
        %v812 = vpack.c.b16 %v800, %v799
        %v813 = vpack.c.b16 %v802, %v801
        %v814 = vpack.c.b16 %v804, %v803
        %v815 = vpack.c.b16 %v806, %v805
        %v816 = vpack.c.b16 %v808, %v807
        %825 = vmatprep.subr.bf16.mxu0 0
        %826 = vmatpush1.bf16.msra.mxu0 %v816
        %827 = vmatprep.subr.bf16.mxu0 0
        %828 = vmatpush1.bf16.msra.mxu0 %v815
        %829 = vmatprep.subr.bf16.mxu0 0
        %830 = vmatpush1.bf16.msra.mxu0 %v814
        %831 = vmatprep.subr.bf16.mxu0 0
        %832 = vmatpush1.bf16.msra.mxu0 %v813
        %833 = vmatprep.subr.bf16.mxu0 0
        %834 = vmatpush1.bf16.msra.mxu0 %v812
        %835 = vmatprep.subr.bf16.mxu0 0
        %836 = vmatpush1.bf16.msra.mxu0 %v811
        %837 = vmatprep.subr.bf16.mxu0 0
        %838 = vmatpush1.bf16.msra.mxu0 %v810
        %839 = vmatprep.subr.bf16.mxu0 0
        %840 = vmatpush1.bf16.msra.mxu0 %v809
        %841 = vmatprep.subr.bf16.mxu0 0
        %842 = vmatpush2.bf16.msra.mxu0 0
        %843 = vmatprep.subr.bf16.mxu0 0
        %844 = vmatpush2.bf16.msra.mxu0 0
        %845 = vmatprep.subr.bf16.mxu0 0
        %846 = vmatpush2.bf16.msra.mxu0 0
        %847 = vmatprep.subr.bf16.mxu0 0
        %848 = vmatpush2.bf16.msra.mxu0 0
        %849 = vmatprep.subr.bf16.mxu0 0
        %850 = vmatpush2.bf16.msra.mxu0 0
        %851 = vmatprep.subr.bf16.mxu0 0
        %852 = vmatpush2.bf16.msra.mxu0 0
        %853 = vmatprep.subr.bf16.mxu0 0
        %854 = vmatpush2.bf16.msra.mxu0 0
        %855 = vmatprep.subr.bf16.mxu0 0
        %856 = vmatpush2.bf16.msra.mxu0 0
        %857 = vmatprep.mubr.bf16.mxu0 0
        %858 = vmatmul.mubr.bf16.gmra.mxu0 %v753
        %v859 = vpop.f32.mrf.mxu0
        %v860 = vadd.f32 %v775, %v859
        %v861 = vpop.f32.mrf.mxu0
        %v862 = vpop.f32.mrf.mxu0
        %v863 = vadd.f32 %v775, %v862
        %v864 = vpop.f32.mrf.mxu0
        %865 = vdwg.mxu0
        %vm866 = vcmask 80896
        %867 = vst.msk [vmem:[%s313] sm:$0xff] %vm866, %v860
        %868 = vst.msk [vmem:[%s313 + $0x8] sm:$0xff] %vm866, %v863
        %s869 = sand.u32 %s182, 1
        %s870 = sand.u32 %s182, 1
        %s871 = smul.addr %s870, 16
        %s872 = scalar_lea.vmem [#allocation6], %s871
        // Predicated region
        $region57: #{tpu_custom_call.1} parent=47 // pred_check
          %p873 = pneg %p192
        $region58: #{tpu_custom_call.1} parent=47 // pred_check_branch
          %875 = sbr.rel (%p873) target = $region60
        $region59: #{tpu_custom_call.1} parent=47 // pred_region
          %s876 = smul.u32 2, %s22
          %s877 = ssub.s32 3, %s876
          %p878 = scmp.lt.s32.totalorder %s877, 2
          %s879 = scalar_select %p878, %s877, 2
          %s880 = smul.u32 128, %s879
          %p881 = scmp.ne.s32.totalorder 0, %s880
          %s882 = smul.addr %s876, 8
          %s883 = scalar_lea.vmem %s7, %s882
          // Predicated region
          $region61: #{tpu_custom_call.1} parent=59 // pred_check
            %p884 = pneg %p881
          $region62: #{tpu_custom_call.1} parent=59 // pred_check_branch
            %886 = sbr.rel (%p884) target = $region64
          $region63: #{tpu_custom_call.1} parent=59 // pred_region
            // Predicated region
            $region65: #{tpu_custom_call.1} parent=63 // pred_check
              _
            $region66: #{tpu_custom_call.1} parent=63 // pred_check_branch
              %888 = sbr.rel (0) target = $region68
            $region67: #{tpu_custom_call.1} parent=63 // pred_region
              // Predicated region
              $region87: #{tpu_custom_call.1} parent=67 // pred_check
                _
              $region88: #{tpu_custom_call.1} parent=67 // pred_check_branch
                %940 = sbr.rel (0) target = $region90
              $region89: #{tpu_custom_call.1} parent=67 // pred_region
                %s941 = sshrl.u32 %s879, 1
                // While loop
                $region91: #{tpu_custom_call.1} parent=89 // loop_pre_header
                  _
                $region92: #{tpu_custom_call.1} parent=89 // loop_header
                  %s943 = sphi 0, %s945
                  %p944 = scmp.ge.s32.totalorder %s943, %s941
                  %s948 = sphi 0, %s957
                  %s949 = sphi %s872, %s960
                  %s950 = sphi %s883, %s961
                $region93: #{tpu_custom_call.1} parent=89 // loop_header_branch
                  %947 = sbr.rel (%p944) target = $region97
                $region94: #{tpu_custom_call.1} parent=89 // loop_body
                  %v951 = vld [vmem:[%s949] sm:$0xff]
                  %952 = vst [vmem:[%s950] sm:$0xff] %v951
                  %v953 = vld [vmem:[%s949 + $0x8] sm:$0xff]
                  %954 = vst [vmem:[%s950 + $0x8] sm:$0xff] %v953
                  %s955 = sadd.s32 1, %s948
                  %p956 = scmp.ge.s32.totalorder %s955, %s941
                  %s957 = scalar_select %p956, 0, %s955
                  %s958 = smul.u32 %s957, 16
                  %s959 = smul.u32 %s957, 16
                  %s960 = scalar_lea.vmem %s872, %s958 [#allocation6]
                  %s961 = scalar_lea.vmem %s883, %s959
                $region95: #{tpu_custom_call.1} parent=89 // loop_footer
                  %s945 = sadd.s32 %s943, 1
                $region96: #{tpu_custom_call.1} parent=89 // loop_footer_branch
                  %942 = sbr.rel target = $region92
                $region97: #{tpu_custom_call.1} parent=89 // loop_exit
                  _
                %s962 = sshrl.u32 %s879, 1
                %s963 = sand.u32 %s879, 1
                %s964 = smul.u32 %s962, 2
                %s965 = smul.u32 8, %s964
                %s966 = scalar_lea.vmem %s872, %s965 [#allocation6]
                %s967 = smul.u32 8, %s964
                %s968 = scalar_lea.vmem %s883, %s967
                // While loop
                $region98: #{tpu_custom_call.1} parent=89 // loop_pre_header
                  _
                $region99: #{tpu_custom_call.1} parent=89 // loop_header
                  %s970 = sphi 0, %s972
                  %p971 = scmp.ge.s32.totalorder %s970, %s963
                  %s975 = sphi 0, %s982
                  %s976 = sphi %s966, %s985
                  %s977 = sphi %s968, %s986
                $region100: #{tpu_custom_call.1} parent=89 // loop_header_branch
                  %974 = sbr.rel (%p971) target = $region104
                $region101: #{tpu_custom_call.1} parent=89 // loop_body
                  %v978 = vld [vmem:[%s976] sm:$0xff]
                  %979 = vst [vmem:[%s977] sm:$0xff] %v978
                  %s980 = sadd.s32 1, %s975
                  %p981 = scmp.ge.s32.totalorder %s980, %s963
                  %s982 = scalar_select %p981, 0, %s980
                  %s983 = smul.u32 %s982, 8
                  %s984 = smul.u32 %s982, 8
                  %s985 = scalar_lea.vmem %s966, %s983 [#allocation6]
                  %s986 = scalar_lea.vmem %s968, %s984
                $region102: #{tpu_custom_call.1} parent=89 // loop_footer
                  %s972 = sadd.s32 %s970, 1
                $region103: #{tpu_custom_call.1} parent=89 // loop_footer_branch
                  %969 = sbr.rel target = $region99
                $region104: #{tpu_custom_call.1} parent=89 // loop_exit
                  _
              $region90: #{tpu_custom_call.1} parent=67 // pred_fallthru
                _
              // Predicated region
              $region105: #{tpu_custom_call.1} parent=67 // pred_check
                _
              $region106: #{tpu_custom_call.1} parent=67 // pred_check_branch
                %988 = sbr.rel target = $region108
              $region107: #{tpu_custom_call.1} parent=67 // pred_region
                _
              $region108: #{tpu_custom_call.1} parent=67 // pred_fallthru
                _
            $region68: #{tpu_custom_call.1} parent=63 // pred_fallthru
              _
            // Predicated region
            $region69: #{tpu_custom_call.1} parent=63 // pred_check
              _
            $region70: #{tpu_custom_call.1} parent=63 // pred_check_branch
              %890 = sbr.rel target = $region72
            $region71: #{tpu_custom_call.1} parent=63 // pred_region
              %s892 = ssub.s32 256, 1
              %s893 = sshrl.u32 %s879, 1
              // While loop
              $region73: #{tpu_custom_call.1} parent=71 // loop_pre_header
                _
              $region74: #{tpu_custom_call.1} parent=71 // loop_header
                %s895 = sphi 0, %s897
                %p896 = scmp.ge.s32.totalorder %s895, %s893
                %s900 = sphi 0, %s909
                %s901 = sphi %s872, %s912
                %s902 = sphi %s883, %s913
              $region75: #{tpu_custom_call.1} parent=71 // loop_header_branch
                %899 = sbr.rel (%p896) target = $region79
              $region76: #{tpu_custom_call.1} parent=71 // loop_body
                %v903 = vld [vmem:[%s901] sm:%s892]
                %904 = vst [vmem:[%s902] sm:%s892] %v903
                %v905 = vld [vmem:[%s901 + $0x8] sm:%s892]
                %906 = vst [vmem:[%s902 + $0x8] sm:%s892] %v905
                %s907 = sadd.s32 1, %s900
                %p908 = scmp.ge.s32.totalorder %s907, %s893
                %s909 = scalar_select %p908, 0, %s907
                %s910 = smul.u32 %s909, 16
                %s911 = smul.u32 %s909, 16
                %s912 = scalar_lea.vmem %s872, %s910 [#allocation6]
                %s913 = scalar_lea.vmem %s883, %s911
              $region77: #{tpu_custom_call.1} parent=71 // loop_footer
                %s897 = sadd.s32 %s895, 1
              $region78: #{tpu_custom_call.1} parent=71 // loop_footer_branch
                %894 = sbr.rel target = $region74
              $region79: #{tpu_custom_call.1} parent=71 // loop_exit
                _
              %s914 = sshrl.u32 %s879, 1
              %s915 = sand.u32 %s879, 1
              %s916 = smul.u32 %s914, 2
              %s917 = smul.u32 8, %s916
              %s918 = scalar_lea.vmem %s872, %s917 [#allocation6]
              %s919 = smul.u32 8, %s916
              %s920 = scalar_lea.vmem %s883, %s919
              // While loop
              $region80: #{tpu_custom_call.1} parent=71 // loop_pre_header
                _
              $region81: #{tpu_custom_call.1} parent=71 // loop_header
                %s922 = sphi 0, %s924
                %p923 = scmp.ge.s32.totalorder %s922, %s915
                %s927 = sphi 0, %s934
                %s928 = sphi %s918, %s937
                %s929 = sphi %s920, %s938
              $region82: #{tpu_custom_call.1} parent=71 // loop_header_branch
                %926 = sbr.rel (%p923) target = $region86
              $region83: #{tpu_custom_call.1} parent=71 // loop_body
                %v930 = vld [vmem:[%s928] sm:%s892]
                %931 = vst [vmem:[%s929] sm:%s892] %v930
                %s932 = sadd.s32 1, %s927
                %p933 = scmp.ge.s32.totalorder %s932, %s915
                %s934 = scalar_select %p933, 0, %s932
                %s935 = smul.u32 %s934, 8
                %s936 = smul.u32 %s934, 8
                %s937 = scalar_lea.vmem %s918, %s935 [#allocation6]
                %s938 = scalar_lea.vmem %s920, %s936
              $region84: #{tpu_custom_call.1} parent=71 // loop_footer
                %s924 = sadd.s32 %s922, 1
              $region85: #{tpu_custom_call.1} parent=71 // loop_footer_branch
                %921 = sbr.rel target = $region81
              $region86: #{tpu_custom_call.1} parent=71 // loop_exit
                _
            $region72: #{tpu_custom_call.1} parent=63 // pred_fallthru
              _
          $region64: #{tpu_custom_call.1} parent=59 // pred_fallthru
            _
          %989 = vnop
        $region60: #{tpu_custom_call.1} parent=47 // pred_fallthru
          _
      $region48: #{tpu_custom_call.1} parent=5 // pred_fallthru
        _
      %p990 = scmp.le.s32.totalorder 2, %s17
      // Predicated region
      $region109: #{tpu_custom_call.1} parent=5 // pred_check
        %p991 = pneg %p990
      $region110: #{tpu_custom_call.1} parent=5 // pred_check_branch
        %993 = sbr.rel (%p991) target = $region112
      $region111: #{tpu_custom_call.1} parent=5 // pred_region
        %s994 = ssub.s32 %s17, 2
        // Predicated region
        $region113: #{tpu_custom_call.1} parent=111 // pred_check
          %p995 = pneg %p198
        $region114: #{tpu_custom_call.1} parent=111 // pred_check_branch
          %997 = sbr.rel (%p995) target = $region116
        $region115: #{tpu_custom_call.1} parent=111 // pred_region
          %s998 = sand.u32 %s183, 1
          %s999 = sand.u32 %s183, 1
          %s1000 = smul.addr %s999, 16
          %s1001 = scalar_lea.vmem [#allocation6], %s1000
        $region116: #{tpu_custom_call.1} parent=111 // pred_fallthru
          _
      $region112: #{tpu_custom_call.1} parent=5 // pred_fallthru
        _
    $region6: #{tpu_custom_call.1} parent=1 // loop_footer
      %s21 = sadd.s32 1, %s17
    $region7: #{tpu_custom_call.1} parent=1 // loop_footer_branch
      %16 = sbr.rel target = $region3
    $region8: #{tpu_custom_call.1} parent=1 // loop_exit
      _
    %1002 = vsyncpa [#allocation3], 1
    %s1003 = scalar_lea.sflag [#allocation3], 1
    %1004 = vsyncpa %s1003, 1
    %1005 = vsyncpa [#allocation5], 1

</llo_original>
